<compile_context>
chip_gen: v6e
topology: v6e:2x2x1
jax: 0.10.0
libtpu: 0.0.40
codegen_flags: <defaults>
</compile_context>

<pallas_src>
import functools

import jax
import jax.numpy as jnp
from jax.experimental import pallas as pl
from jax.experimental.pallas import tpu as pltpu

_LANE = 128       # TPU lane width; L tiles are multiples of this
_HALO_BLK = 128   # lane-aligned halo window read from the previous tile


def _elu(x):
    # torch.nn.ELU(alpha=1.0). exp(x)-1 instead of expm1 keeps Mosaic lowering
    # simple; abs error near 0- is far below the bf16 matmul noise.
    one = jnp.asarray(1.0, x.dtype)
    return jnp.where(x > 0, x, jnp.exp(x) - one)


def _resnet_block_kernel(x_ref, halo_ref, halo0_ref, w1_ref, b1_ref, wf_ref,
                         bf_ref, o_ref, *, tl, pad0, k0, d0, dim, stack_taps):
    """One (batch, L-tile) step: ELU -> dilated conv(k0) -> ELU -> fused
    (1x1 conv + conv shortcut + residual add), fully fused."""
    l = pl.program_id(1)

    x = x_ref[0]                                     # (dim, tl), compute dtype

    # ---- left halo of the causally padded signal for this tile ---------------
    # tile l needs padded-signal columns [l*tl - pad0, l*tl): the reflect pad
    # (tile 0, precomputed in the wrapper) or the tail of the previous tile.
    halo_prev = halo_ref[0][:, _HALO_BLK - pad0:]                    # (dim, pad0)
    halo_refl = halo0_ref[0][:, _HALO_BLK - pad0:]                   # (dim, pad0)
    halo = jnp.where(l == 0, halo_refl, halo_prev)   # select: no 0*inf hazard

    # ---- block[0]: ELU over the (halo | tile) window (compute dtype) ----------
    h1 = _elu(jnp.concatenate([halo, x], axis=1))    # (dim, tl + pad0)

    # ---- block[1]: dilated conv with k0 taps -----------------------------------
    if stack_taps:
        # stack the k0 lane-shifted views on the channel axis -> ONE deep MXU
        # contraction against the (hidden, k0*dim) reshaped weight.
        h1s = jnp.concatenate([h1[:, k * d0:k * d0 + tl] for k in range(k0)],
                              axis=0)                                # (k0*dim, tl)
        out1 = jnp.dot(w1_ref[...], h1s,
                       preferred_element_type=jnp.float32) + b1_ref[...]
    else:
        # large dim: per-tap contraction already fills the MXU depth; skip the
        # (k0*dim, tl) staging slab and accumulate k0 dots in f32.
        out1 = b1_ref[...] + sum(
            jnp.dot(w1_ref[:, k * dim:(k + 1) * dim],
                    h1[:, k * d0:k * d0 + tl],
                    preferred_element_type=jnp.float32)
            for k in range(k0))                                      # (hidden, tl)

    # ---- block[2]+[3] and the conv shortcut, fused into ONE MXU contraction ---
    #   out2 + sc = [W2 | Ws] @ [ELU(out1) ; x] + (b2 + bs)
    h2 = _elu(out1.astype(x.dtype))                  # (hidden, tl), compute dtype
    z = jnp.concatenate([h2, x], axis=0)             # (hidden + dim, tl)
    out = jnp.dot(wf_ref[...], z,
                  preferred_element_type=jnp.float32) + bf_ref[...]  # (dim, tl)

    o_ref[0] = out.astype(o_ref.dtype)


def _block_bytes_per_col(dim, hidden, k0, cd_item, out_item, stack_taps):
    """VMEM bytes per L column: double-buffered I/O blocks + in-kernel temps."""
    return (2 * dim * cd_item                              # x tile (double-buffered)
            + 2 * dim * out_item                           # out tile (double-buffered)
            + dim * cd_item                                # ELU'd window
            + (k0 * dim * cd_item if stack_taps else 0)    # stacked-tap slab
            + hidden * 4 + hidden * cd_item                # out1 (f32) + h2
            + (hidden + dim) * cd_item                     # fused [h2 ; x]
            + dim * 4)                                     # fused out (f32)


def _fixed_bytes(dim, hidden, k0, cd_item):
    """Tile-size-independent VMEM: halo blocks, weights (double-buffered), biases."""
    halo = 2 * 2 * dim * _HALO_BLK * cd_item
    weights = 2 * (hidden * k0 * dim + dim * (hidden + dim)) * cd_item
    biases = 2 * (hidden + dim) * 4
    return halo + weights + biases


def _default_tile_len(lp128, per_col, fixed, budget_bytes):
    """Largest 128-multiple tile whose pipelined blocks fit the VMEM budget.
    The default 12 MiB budget stays under v5e's 16 MiB default scoped limit and
    v7x's 32 MiB scoped / 64 MiB physical VMEM."""
    avail = max(budget_bytes - fixed, _LANE * per_col)
    tl = (avail // max(per_col, 1)) // _LANE * _LANE
    return int(max(_LANE, min(tl, 4096, lp128)))


def encodec_resnet_block(x, W1, b1, W2, b2, Ws, bs, *, dilation, tl=None,
                         compute_dtype=jnp.bfloat16, out_dtype=None,
                         stack_taps=None, vmem_budget_bytes=12 << 20):
    """Fused EncodecResnetBlock forward.

    x : (B, dim, L) in PyTorch (N, C, L) layout.
    W1: (hidden, dim, k0)  effective (weight-normed) conv #1 weight.
    W2: (dim, hidden, 1)   conv #2 weight.   Ws: (dim, dim, 1) shortcut weight.
    b1/b2/bs: 1-D biases.
    """
    B, dim, L = x.shape
    hidden, dim_in, k0 = W1.shape
    assert dim_in == dim
    d0 = dilation
    pad0 = (k0 - 1) * d0                       # causal padding_total (stride=1)
    assert 1 <= pad0 <= _HALO_BLK
    # TODO(synk): the PyTorch _pad1d small-input branch (L <= padding_total) is
    # not reproduced; Encodec always runs this block with L >> padding_total.
    assert L > pad0

    out_dtype = x.dtype if out_dtype is None else out_dtype
    if stack_taps is None:
        # past ~512 stacked-K the single matmul no longer saves MXU pushes but
        # still pays the (k0*dim, tl) staging slab -> switch to accumulating dots
        stack_taps = (k0 * dim) <= 512

    cd_item = jnp.dtype(compute_dtype).itemsize
    out_item = jnp.dtype(out_dtype).itemsize
    per_col = _block_bytes_per_col(dim, hidden, k0, cd_item, out_item, stack_taps)
    fixed = _fixed_bytes(dim, hidden, k0, cd_item)

    lp128 = ((L + _LANE - 1) // _LANE) * _LANE
    if tl is None:
        tl = _default_tile_len(lp128, per_col, fixed, vmem_budget_bytes)
        # v7x megacore: when B == 1 keep >= 2 grid steps so both TCs get work.
        if B == 1 and tl >= lp128 and lp128 >= 2 * _LANE:
            tl = max(_LANE, (lp128 // 2) // _LANE * _LANE)
    assert tl % _LANE == 0 and tl > pad0
    n_l = (L + tl - 1) // tl
    Lp = n_l * tl

    # Input is streamed in compute_dtype (bf16 halves the x + halo HBM bytes);
    # all matmul accumulation stays f32 inside the kernel.  Right-pad L to a
    # multiple of the tile; zeros only influence the discarded tail because
    # every conv here is causal / pointwise.
    xc = x.astype(compute_dtype)
    if Lp != L:
        xc = jnp.pad(xc, ((0, 0), (0, 0), (0, Lp - L)))

    # tile-0 reflect halo, precomputed once in the wrapper (keeps per-column
    # slicing and the halo blend entirely off the per-step hot path).
    refl = xc[:, :, 1:pad0 + 1][:, :, ::-1]                        # x[pad0..1]
    halo0 = jnp.pad(refl, ((0, 0), (0, 0), (_HALO_BLK - pad0, 0)))  # (B, dim, 128)

    # Weight-layout glue (one-time): fold the k0 dilated taps of conv #1 into a
    # (hidden, k0*dim) matrix; fuse the 1x1 conv and the shortcut conv into one
    # (dim, hidden+dim) matrix with summed bias.  Operands pre-cast to bf16.
    w1s = jnp.transpose(W1, (0, 2, 1)).reshape(hidden, k0 * dim).astype(compute_dtype)
    wf = jnp.concatenate([W2[:, :, 0], Ws[:, :, 0]], axis=1).astype(compute_dtype)
    b1c = b1.reshape(hidden, 1).astype(jnp.float32)
    bfc = (b2 + bs).reshape(dim, 1).astype(jnp.float32)

    hb = tl // _HALO_BLK

    kernel = functools.partial(_resnet_block_kernel, tl=tl, pad0=pad0, k0=k0,
                               d0=d0, dim=dim, stack_taps=stack_taps)

    flops = 2 * B * Lp * (k0 * dim * hidden + (hidden + dim) * dim)
    transcendentals = B * Lp * (dim + hidden)                      # the two ELUs
    bytes_accessed = int(B * dim * Lp * cd_item * (1.0 + _HALO_BLK / tl)
                         + B * dim * Lp * out_item
                         + (w1s.size + wf.size) * cd_item
                         + (b1c.size + bfc.size) * 4)

    # Explicit VMEM ceiling: generous vs the estimate, but clipped so it stays
    # safe on v7x's 64 MiB physical VMEM (and trivially on v5e/v6e's 128 MiB).
    est = fixed + tl * per_col
    vmem_limit = int(min(max(2 * est + (2 << 20), 20 << 20), 40 << 20))

    out = pl.pallas_call(
        kernel,
        out_shape=jax.ShapeDtypeStruct((B, dim, Lp), out_dtype),
        grid=(B, n_l),
        in_specs=[
            # current L tile of the input (lane-aligned, compute dtype)
            pl.BlockSpec((1, dim, tl), lambda b, l: (b, 0, l)),
            # lane-aligned 128-wide halo window ending at this tile's start
            # (tail of the previous tile; placeholder read when l == 0)
            pl.BlockSpec((1, dim, _HALO_BLK),
                         lambda b, l: (b, 0, jnp.maximum(l * hb - 1, 0))),
            # precomputed reflect halo for tile 0 (constant block index -> not
            # re-fetched across l)
            pl.BlockSpec((1, dim, _HALO_BLK), lambda b, l: (b, 0, 0)),
            pl.BlockSpec((hidden, k0 * dim), lambda b, l: (0, 0)),   # W1 (stacked taps)
            pl.BlockSpec((hidden, 1), lambda b, l: (0, 0)),          # b1
            pl.BlockSpec((dim, hidden + dim), lambda b, l: (0, 0)),  # [W2 | Ws]
            pl.BlockSpec((dim, 1), lambda b, l: (0, 0)),             # b2 + bs
        ],
        out_specs=pl.BlockSpec((1, dim, tl), lambda b, l: (b, 0, l)),
        compiler_params=pltpu.CompilerParams(
            # no cross-tile carry (the halo comes from the input window), so
            # both axes can shard across v7x's two TensorCores; no-op on v5e/v6e.
            dimension_semantics=("parallel", "parallel"),
            vmem_limit_bytes=vmem_limit),
        cost_estimate=pl.CostEstimate(flops=int(flops),
                                      transcendentals=int(transcendentals),
                                      bytes_accessed=bytes_accessed),
    )(xc, xc, halo0, w1s, b1c, wf, bfc)

    return out[:, :, :L]


def weight_norm(v, g):
    # torch weight_norm(dim=0): W = g * v / ||v||  (norm over all dims but 0)
    norm = jnp.sqrt(jnp.sum(v * v, axis=(1, 2), keepdims=True))
    return g * v / norm


def ref_forward(x, W1, b1, W2, b2, Ws, bs, dilation):
    """Pure-JAX f32 reference with the exact PyTorch semantics."""
    B, dim, L = x.shape
    k0 = W1.shape[2]
    d0 = dilation
    pad0 = (k0 - 1) * d0
    xpad = jnp.pad(x, ((0, 0), (0, 0), (pad0, 0)), mode="reflect")
    h1 = jax.nn.elu(xpad)
    out1 = sum(jnp.einsum("oi,bil->bol", W1[:, :, k], h1[:, :, k * d0:k * d0 + L])
               for k in range(k0)) + b1[None, :, None]
    h2 = jax.nn.elu(out1)
    out2 = jnp.einsum("oi,bil->bol", W2[:, :, 0], h2) + b2[None, :, None]
    sc = jnp.einsum("oi,bil->bol", Ws[:, :, 0], x) + bs[None, :, None]
    return sc + out2


if __name__ == "__main__":
    # EncodecResnetBlock defaults: residual_kernel_size=3, compress=2,
    # dilations=[2, 1], use_conv_shortcut=True, causal reflect padding.
    B, dim, L = 2, 16, 512
    compress = 2
    hidden = dim // compress
    k0, d0 = 3, 2

    key = jax.random.PRNGKey(0)
    ks = jax.random.split(key, 10)
    x = jax.random.normal(ks[0], (B, dim, L), jnp.float32)

    # weight-norm parameters (v, g) -> effective weights
    v1 = jax.random.normal(ks[1], (hidden, dim, k0), jnp.float32) * 0.3
    g1 = 1.0 + 0.1 * jax.random.normal(ks[2], (hidden, 1, 1), jnp.float32)
    b1 = 0.1 * jax.random.normal(ks[3], (hidden,), jnp.float32)
    v2 = jax.random.normal(ks[4], (dim, hidden, 1), jnp.float32) * 0.3
    g2 = 1.0 + 0.1 * jax.random.normal(ks[5], (dim, 1, 1), jnp.float32)
    b2 = 0.1 * jax.random.normal(ks[6], (dim,), jnp.float32)
    vs = jax.random.normal(ks[7], (dim, dim, 1), jnp.float32) * 0.3
    gs = 1.0 + 0.1 * jax.random.normal(ks[8], (dim, 1, 1), jnp.float32)
    bs = 0.1 * jax.random.normal(ks[9], (dim,), jnp.float32)

    W1 = weight_norm(v1, g1)     # (hidden, dim, 3)
    W2 = weight_norm(v2, g2)     # (dim, hidden, 1)
    Ws = weight_norm(vs, gs)     # (dim, dim, 1)

    ref = ref_forward(x, W1, b1, W2, b2, Ws, bs, d0)

    # f32 exact check: tl=128 exercises the multi-tile halo path (precomputed
    # reflect halo for tile 0 + carried halos) with the stacked-tap MXU path.
    out_f32 = encodec_resnet_block(x, W1, b1, W2, b2, Ws, bs, dilation=d0,
                                   tl=128, compute_dtype=jnp.float32)
    out_f32 = jax.block_until_ready(out_f32)
    assert out_f32.shape == (B, dim, L)
    err_f32 = float(jnp.max(jnp.abs(out_f32 - ref)))
    assert err_f32 < 1e-4, f"f32 (stacked taps) mismatch vs reference: {err_f32}"

    # f32 exact check of the accumulating-taps path (used at large dim).
    out_acc = encodec_resnet_block(x, W1, b1, W2, b2, Ws, bs, dilation=d0,
                                   tl=128, compute_dtype=jnp.float32,
                                   stack_taps=False)
    out_acc = jax.block_until_ready(out_acc)
    err_acc = float(jnp.max(jnp.abs(out_acc - ref)))
    assert err_acc < 1e-4, f"f32 (accumulating taps) mismatch vs reference: {err_acc}"

    # performance path: bf16 input/halo streams + bf16 MXU operands, f32
    # accumulation, VMEM-budgeted default tile, fused 1x1+shortcut contraction.
    out_bf16 = encodec_resnet_block(x, W1, b1, W2, b2, Ws, bs, dilation=d0,
                                    compute_dtype=jnp.bfloat16)
    out_bf16 = jax.block_until_ready(out_bf16)
    err_bf16 = float(jnp.max(jnp.abs(out_bf16 - ref)))
    assert err_bf16 < 7.5e-2, f"bf16 kernel mismatch vs reference: {err_bf16}"

    print("KERNEL_OK")
</pallas_src>

<mosaic_0001>
module attributes {stable_mosaic.version = 11 : i64} {
  func.func @_resnet_block_kernel(%arg0: i32, %arg1: i32, %arg2: memref<1x16x128xf32, #tpu.memory_space<vmem>>, %arg3: memref<1x16x128xf32, #tpu.memory_space<vmem>>, %arg4: memref<1x16x128xf32, #tpu.memory_space<vmem>>, %arg5: memref<8x48xf32, #tpu.memory_space<vmem>>, %arg6: memref<8x1xf32, #tpu.memory_space<vmem>>, %arg7: memref<16x24xf32, #tpu.memory_space<vmem>>, %arg8: memref<16x1xf32, #tpu.memory_space<vmem>>, %arg9: memref<1x16x128xf32, #tpu.memory_space<vmem>>) attributes {dimension_semantics = [#tpu.dimension_semantics<parallel>, #tpu.dimension_semantics<parallel>], iteration_bounds = array<i64: 2, 4>, scalar_prefetch = 0 : i64, scratch_operands = 0 : i64, tpu.core_type = #tpu.core_type<tc>, window_params = [{transform_indices = @transform_0, window_bounds = array<i64: 1, 16, 128>}, {transform_indices = @transform_1, window_bounds = array<i64: 1, 16, 128>}, {transform_indices = @transform_2, window_bounds = array<i64: 1, 16, 128>}, {pipeline_mode = #tpu.pipeline_mode<synchronous>, transform_indices = @transform_3, window_bounds = array<i64: 8, 48>}, {pipeline_mode = #tpu.pipeline_mode<synchronous>, transform_indices = @transform_4, window_bounds = array<i64: 8, 1>}, {pipeline_mode = #tpu.pipeline_mode<synchronous>, transform_indices = @transform_5, window_bounds = array<i64: 16, 24>}, {pipeline_mode = #tpu.pipeline_mode<synchronous>, transform_indices = @transform_6, window_bounds = array<i64: 16, 1>}, {transform_indices = @transform_7, window_bounds = array<i64: 1, 16, 128>}]} {
    %c0 = arith.constant 0 : index
    %c0_0 = arith.constant 0 : index
    %c0_1 = arith.constant 0 : index
    %0 = vector.load %arg2[%c0, %c0_0, %c0_1] : memref<1x16x128xf32, #tpu.memory_space<vmem>>, vector<1x16x128xf32>
    %1 = vector.shape_cast %0 : vector<1x16x128xf32> to vector<16x128xf32>
    %c0_2 = arith.constant 0 : index
    %c0_3 = arith.constant 0 : index
    %c0_4 = arith.constant 0 : index
    %2 = vector.load %arg3[%c0_2, %c0_3, %c0_4] : memref<1x16x128xf32, #tpu.memory_space<vmem>>, vector<1x16x128xf32>
    %3 = vector.shape_cast %2 : vector<1x16x128xf32> to vector<16x128xf32>
    %4 = vector.extract_strided_slice %3 {offsets = [0, 124], sizes = [16, 4], strides = [1, 1]} : vector<16x128xf32> to vector<16x4xf32>
    %c0_5 = arith.constant 0 : index
    %c0_6 = arith.constant 0 : index
    %c0_7 = arith.constant 0 : index
    %5 = vector.load %arg4[%c0_5, %c0_6, %c0_7] : memref<1x16x128xf32, #tpu.memory_space<vmem>>, vector<1x16x128xf32>
    %6 = vector.shape_cast %5 : vector<1x16x128xf32> to vector<16x128xf32>
    %7 = vector.extract_strided_slice %6 {offsets = [0, 124], sizes = [16, 4], strides = [1, 1]} : vector<16x128xf32> to vector<16x4xf32>
    %c0_i32 = arith.constant 0 : i32
    %8 = arith.cmpi eq, %arg1, %c0_i32 : i32
    %9 = arith.select %8, %7, %4 : vector<16x4xf32>
    %10 = tpu.concatenate %9, %1 in 1 : vector<16x4xf32>, vector<16x128xf32> -> vector<16x132xf32>
    %cst = arith.constant 0.000000e+00 : f32
    %11 = vector.broadcast %cst : f32 to vector<16x132xf32>
    %12 = arith.cmpf ogt, %10, %11 : vector<16x132xf32>
    %13 = math.exp %10 : vector<16x132xf32>
    %cst_8 = arith.constant 1.000000e+00 : f32
    %14 = vector.broadcast %cst_8 : f32 to vector<16x132xf32>
    %15 = arith.subf %13, %14 : vector<16x132xf32>
    %16 = arith.select %12, %10, %15 : vector<16x132xi1>, vector<16x132xf32>
    %17 = vector.extract_strided_slice %16 {offsets = [0, 0], sizes = [16, 128], strides = [1, 1]} : vector<16x132xf32> to vector<16x128xf32>
    %18 = vector.extract_strided_slice %16 {offsets = [0, 2], sizes = [16, 128], strides = [1, 1]} : vector<16x132xf32> to vector<16x128xf32>
    %19 = vector.extract_strided_slice %16 {offsets = [0, 4], sizes = [16, 128], strides = [1, 1]} : vector<16x132xf32> to vector<16x128xf32>
    %20 = tpu.concatenate %17, %18, %19 in 0 : vector<16x128xf32>, vector<16x128xf32>, vector<16x128xf32> -> vector<48x128xf32>
    %c0_9 = arith.constant 0 : index
    %c0_10 = arith.constant 0 : index
    %21 = vector.load %arg5[%c0_9, %c0_10] : memref<8x48xf32, #tpu.memory_space<vmem>>, vector<8x48xf32>
    %cst_11 = arith.constant dense<0.000000e+00> : vector<8x128xf32>
    %22 = tpu.matmul %21, %20, %cst_11 {dimension_numbers = #tpu.dot_dimension_numbers<[1], [0], [0], [1], [0, 0, 1, 1], [], []>} : vector<8x48xf32>, vector<48x128xf32>, vector<8x128xf32> -> vector<8x128xf32>
    %c0_12 = arith.constant 0 : index
    %c0_13 = arith.constant 0 : index
    %23 = vector.load %arg6[%c0_12, %c0_13] : memref<8x1xf32, #tpu.memory_space<vmem>>, vector<8x1xf32>
    %24 = vector.broadcast %23 : vector<8x1xf32> to vector<8x128xf32>
    %25 = arith.addf %22, %24 : vector<8x128xf32>
    %cst_14 = arith.constant 0.000000e+00 : f32
    %26 = vector.broadcast %cst_14 : f32 to vector<8x128xf32>
    %27 = arith.cmpf ogt, %25, %26 : vector<8x128xf32>
    %28 = math.exp %25 : vector<8x128xf32>
    %cst_15 = arith.constant 1.000000e+00 : f32
    %29 = vector.broadcast %cst_15 : f32 to vector<8x128xf32>
    %30 = arith.subf %28, %29 : vector<8x128xf32>
    %31 = arith.select %27, %25, %30 : vector<8x128xi1>, vector<8x128xf32>
    %32 = tpu.concatenate %31, %1 in 0 : vector<8x128xf32>, vector<16x128xf32> -> vector<24x128xf32>
    %c0_16 = arith.constant 0 : index
    %c0_17 = arith.constant 0 : index
    %33 = vector.load %arg7[%c0_16, %c0_17] : memref<16x24xf32, #tpu.memory_space<vmem>>, vector<16x24xf32>
    %cst_18 = arith.constant dense<0.000000e+00> : vector<16x128xf32>
    %34 = tpu.matmul %33, %32, %cst_18 {dimension_numbers = #tpu.dot_dimension_numbers<[1], [0], [0], [1], [0, 0, 1, 1], [], []>} : vector<16x24xf32>, vector<24x128xf32>, vector<16x128xf32> -> vector<16x128xf32>
    %c0_19 = arith.constant 0 : index
    %c0_20 = arith.constant 0 : index
    %35 = vector.load %arg8[%c0_19, %c0_20] : memref<16x1xf32, #tpu.memory_space<vmem>>, vector<16x1xf32>
    %36 = vector.broadcast %35 : vector<16x1xf32> to vector<16x128xf32>
    %37 = arith.addf %34, %36 : vector<16x128xf32>
    %c0_21 = arith.constant 0 : index
    %c0_22 = arith.constant 0 : index
    %c0_23 = arith.constant 0 : index
    %38 = vector.load %arg9[%c0_21, %c0_22, %c0_23] : memref<1x16x128xf32, #tpu.memory_space<vmem>>, vector<1x16x128xf32>
    %39 = vector.shape_cast %38 : vector<1x16x128xf32> to vector<16x128xf32>
    %40 = vector.shape_cast %37 : vector<16x128xf32> to vector<1x16x128xf32>
    tpu.vector_store %arg9[%c0_21, %c0_22, %c0_23], %40 {strides = array<i32>} : memref<1x16x128xf32, #tpu.memory_space<vmem>>, vector<1x16x128xf32>,
    return
  }
  func.func @transform_0(%arg0: i32, %arg1: i32) -> (i32, i32, i32) {
    %c0_i32 = arith.constant 0 : i32
    %c0_i32_0 = arith.constant 0 : i32
    return %arg0, %c0_i32, %arg1 : i32, i32, i32
  }
  func.func @transform_1(%arg0: i32, %arg1: i32) -> (i32, i32, i32) {
    %c1_i32 = arith.constant 1 : i32
    %0 = arith.muli %arg1, %c1_i32 : i32
    %c1_i32_0 = arith.constant 1 : i32
    %1 = arith.subi %0, %c1_i32_0 : i32
    %c0_i32 = arith.constant 0 : i32
    %2 = arith.maxsi %1, %c0_i32 : i32
    %c0_i32_1 = arith.constant 0 : i32
    %c0_i32_2 = arith.constant 0 : i32
    return %arg0, %c0_i32_1, %2 : i32, i32, i32
  }
  func.func @transform_2(%arg0: i32, %arg1: i32) -> (i32, i32, i32) {
    %c0_i32 = arith.constant 0 : i32
    %c0_i32_0 = arith.constant 0 : i32
    %c0_i32_1 = arith.constant 0 : i32
    return %arg0, %c0_i32, %c0_i32_0 : i32, i32, i32
  }
  func.func @transform_3(%arg0: i32, %arg1: i32) -> (i32, i32) {
    %c0_i32 = arith.constant 0 : i32
    %c0_i32_0 = arith.constant 0 : i32
    %c0_i32_1 = arith.constant 0 : i32
    return %c0_i32, %c0_i32_0 : i32, i32
  }
  func.func @transform_4(%arg0: i32, %arg1: i32) -> (i32, i32) {
    %c0_i32 = arith.constant 0 : i32
    %c0_i32_0 = arith.constant 0 : i32
    %c0_i32_1 = arith.constant 0 : i32
    return %c0_i32, %c0_i32_0 : i32, i32
  }
  func.func @transform_5(%arg0: i32, %arg1: i32) -> (i32, i32) {
    %c0_i32 = arith.constant 0 : i32
    %c0_i32_0 = arith.constant 0 : i32
    %c0_i32_1 = arith.constant 0 : i32
    return %c0_i32, %c0_i32_0 : i32, i32
  }
  func.func @transform_6(%arg0: i32, %arg1: i32) -> (i32, i32) {
    %c0_i32 = arith.constant 0 : i32
    %c0_i32_0 = arith.constant 0 : i32
    %c0_i32_1 = arith.constant 0 : i32
    return %c0_i32, %c0_i32_0 : i32, i32
  }
  func.func @transform_7(%arg0: i32, %arg1: i32) -> (i32, i32, i32) {
    %c0_i32 = arith.constant 0 : i32
    %c0_i32_0 = arith.constant 0 : i32
    return %arg0, %c0_i32, %arg1 : i32, i32, i32
  }
}

</mosaic_0001>

<llo_original>
// kernel: tpu_custom_call.1
$region0: #{tpu_custom_call.1}
  #allocation0 [shape = 'u32[]', space=smem, size = 0x4, offset = 0x4, fixed_abs, tag = 'smem constant byte address 0x4 - core index']
  #allocation1 [shape = 'u32[144,128]{1,0:T(1,128)}', space=vmem, size = 0x12000, scoped, tag = 'internal scratch']
  %s0 = inlined_call_operand.hbm [shape: f32[2,16,512], index: 0, kind: input, shape index: {}]
  %s1 = inlined_call_operand.hbm [shape: f32[2,16,512], index: 1, kind: input, shape index: {}]
  %s2 = inlined_call_operand.hbm [shape: f32[2,16,128], index: 2, kind: input, shape index: {}]
  %s3 = inlined_call_operand.vmem [shape: f32[8,48], index: 3, kind: input, shape index: {}]
  %s4 = inlined_call_operand.vmem [shape: f32[8,1], index: 4, kind: input, shape index: {}]
  %s5 = inlined_call_operand.vmem [shape: f32[16,24], index: 5, kind: input, shape index: {}]
  %s6 = inlined_call_operand.vmem [shape: f32[16,1], index: 6, kind: input, shape index: {}]
  %s7 = inlined_call_operand.hbm [shape: f32[2,16,512], index: 7, kind: output, shape index: {}]
  %s8 = sld [smem:[#allocation0]]
  $region73: #{tpu_custom_call.1} parent=0
    _
  %s10 = ssub.s32 1, %s8
  %s11 = scalar_select 0, %s10, %s8
  $region1: #{tpu_custom_call.1} parent=0
    #allocation2 [shape = 'u8[16384]{0}', space=vmem, size = 0x4000, scoped, tag = 'input window, operand 0']
    #allocation3 [shape = 's32[2]{0}', space=sflag, size = 0x8, scoped, tag = 'scoped memory for tpu_custom_call.1']
    #allocation4 [shape = 's32[2]{0}', space=sflag, size = 0x8, scoped, tag = 'scoped memory for tpu_custom_call.1']
    #allocation5 [shape = 'u8[16384]{0}', space=vmem, size = 0x4000, scoped, tag = 'input window, operand 1']
    #allocation6 [shape = 's32[2]{0}', space=sflag, size = 0x8, scoped, tag = 'scoped memory for tpu_custom_call.1']
    #allocation7 [shape = 'u8[16384]{0}', space=vmem, size = 0x4000, scoped, tag = 'input window, operand 2']
    #allocation8 [shape = 'u8[16384]{0}', space=vmem, size = 0x4000, scoped, tag = 'output window, operand 0']
    %12 = vsyncpa [#allocation3], 0
    %s13 = scalar_lea.sflag [#allocation3], 1
    %14 = vsyncpa %s13, 0
    %15 = vsyncpa [#allocation6], 0
    %s16 = scalar_lea.sflag [#allocation6], 1
    %17 = vsyncpa %s16, 0
    %18 = vsyncpa [#allocation4], 0
    %s19 = scalar_lea.sflag [#allocation4], 1
    %20 = vsyncpa %s19, 0
    loop: start=0, step=1, limit=10
    $region2: #{tpu_custom_call.1} parent=1 // loop_pre_header
      _
    $region3: #{tpu_custom_call.1} parent=1 // loop_header
      %s22 = sphi 0, %s26
      %p23 = scmp.ge.s32.totalorder %s22, 10
      %s29 = sphi 0, %s41
      %s30 = sphi 0, %s37
      %s31 = sphi 0, %s29
      %s32 = sphi 0, %s30
      %s33 = sphi 0, %s31
      %s34 = sphi 0, %s32
      %s46 = sphi 0, %s48
      %s49 = sphi 0, %s46
      %s50 = sphi 0, %s49
      %s66 = sphi 0, %s50
      %s80 = sphi 0, %s82
      %s83 = sphi 0, %s80
      %s84 = sphi 0, %s83
      %s100 = sphi 0, %s84
      %s106 = sphi 0, %s108
      %s109 = sphi 0, %s106
      %s110 = sphi 0, %s109
      %s126 = sphi 0, %s110
      %s130 = sphi 0, %s130
      %s132 = sphi 0, %s130
      %s133 = sphi 0, %s132
      %s147 = sphi 0, %s133
      %s151 = sphi 0, %s151
      %s153 = sphi 0, %s151
      %s154 = sphi 0, %s153
      %s168 = sphi 0, %s154
      %s172 = sphi 0, %s172
      %s174 = sphi 0, %s172
      %s175 = sphi 0, %s174
      %s189 = sphi 0, %s175
      %s193 = sphi 0, %s193
      %s195 = sphi 0, %s193
      %s196 = sphi 0, %s195
      %s210 = sphi 0, %s196
      %s218 = sphi 0, %s220
      %s221 = sphi 0, %s218
      %s222 = sphi 0, %s221
      %s238 = sphi 0, %s222
    $region4: #{tpu_custom_call.1} parent=1 // loop_header_branch
      %25 = sbr.rel (%p23) target = $region8
    $region5: #{tpu_custom_call.1} parent=1 // loop_body
      %s27 = ssub.s32 %s22, 1
      %s28 = ssub.s32 %s22, 2
      %s35 = sadd.s32 1, %s30
      %p36 = scmp.ge.s32.totalorder %s35, 4
      %s37 = scalar_select %p36, 0, %s35
      %s38 = sadd.s32 1, %s29
      %s39 = scalar_select %p36, %s38, %s29
      %p40 = scmp.ge.s32.totalorder %s39, 2
      %s41 = scalar_select %p40, 0, %s39
      %s42 = ssub.s32 %s29, %s41
      %s43 = ssub.s32 %s30, %s37
      %s44 = sor.u32 %s42, %s43
      %p45 = scmp.eq.s32.totalorder %s44, 0
      %s47 = sadd.s32 %s46, 1
      %s48 = scalar_select %p45, %s46, %s47
      %p51 = pneg %p45
      %p52 = scmp.eq.s32.totalorder %s22, 7
      %p53 = por %p51, %p52
      %p54 = scmp.ne.s32.totalorder %s46, %s49
      %p55 = scmp.eq.s32.totalorder %s22, 0
      %p56 = por %p54, %p55
      %p57 = scmp.ne.s32.totalorder %s46, %s49
      %p58 = scmp.eq.s32.totalorder %s27, 7
      %p59 = por %p57, %p58
      %p60 = scmp.ne.s32.totalorder %s49, %s50
      %p61 = scmp.eq.s32.totalorder %s27, 0
      %p62 = por %p60, %p61
      %p63 = scmp.ne.s32.totalorder %s49, %s50
      %p64 = scmp.eq.s32.totalorder %s28, 7
      %p65 = por %p63, %p64
      %p67 = scmp.ne.s32.totalorder %s50, %s66
      %p68 = scmp.eq.s32.totalorder %s28, 0
      %p69 = por %p67, %p68
      %s70 = ssub.s32 %s30, 1
      %p71 = scmp.gt.s32.totalorder %s70, 0
      %s72 = scalar_select %p71, %s70, 0
      %s73 = ssub.s32 %s37, 1
      %p74 = scmp.gt.s32.totalorder %s73, 0
      %s75 = scalar_select %p74, %s73, 0
      %s76 = ssub.s32 %s29, %s41
      %s77 = ssub.s32 %s72, %s75
      %s78 = sor.u32 %s76, %s77
      %p79 = scmp.eq.s32.totalorder %s78, 0
      %s81 = sadd.s32 %s80, 1
      %s82 = scalar_select %p79, %s80, %s81
      %p85 = pneg %p79
      %p86 = scmp.eq.s32.totalorder %s22, 7
      %p87 = por %p85, %p86
      %p88 = scmp.ne.s32.totalorder %s80, %s83
      %p89 = scmp.eq.s32.totalorder %s22, 0
      %p90 = por %p88, %p89
      %p91 = scmp.ne.s32.totalorder %s80, %s83
      %p92 = scmp.eq.s32.totalorder %s27, 7
      %p93 = por %p91, %p92
      %p94 = scmp.ne.s32.totalorder %s83, %s84
      %p95 = scmp.eq.s32.totalorder %s27, 0
      %p96 = por %p94, %p95
      %p97 = scmp.ne.s32.totalorder %s83, %s84
      %p98 = scmp.eq.s32.totalorder %s28, 7
      %p99 = por %p97, %p98
      %p101 = scmp.ne.s32.totalorder %s84, %s100
      %p102 = scmp.eq.s32.totalorder %s28, 0
      %p103 = por %p101, %p102
      %s104 = ssub.s32 %s29, %s41
      %p105 = scmp.eq.s32.totalorder %s104, 0
      %s107 = sadd.s32 %s106, 1
      %s108 = scalar_select %p105, %s106, %s107
      %p111 = pneg %p105
      %p112 = scmp.eq.s32.totalorder %s22, 7
      %p113 = por %p111, %p112
      %p114 = scmp.ne.s32.totalorder %s106, %s109
      %p115 = scmp.eq.s32.totalorder %s22, 0
      %p116 = por %p114, %p115
      %p117 = scmp.ne.s32.totalorder %s106, %s109
      %p118 = scmp.eq.s32.totalorder %s27, 7
      %p119 = por %p117, %p118
      %p120 = scmp.ne.s32.totalorder %s109, %s110
      %p121 = scmp.eq.s32.totalorder %s27, 0
      %p122 = por %p120, %p121
      %p123 = scmp.ne.s32.totalorder %s109, %s110
      %p124 = scmp.eq.s32.totalorder %s28, 7
      %p125 = por %p123, %p124
      %p127 = scmp.ne.s32.totalorder %s110, %s126
      %p128 = scmp.eq.s32.totalorder %s28, 0
      %p129 = por %p127, %p128
      %s131 = sadd.s32 %s130, 1
      %p134 = scmp.eq.s32.totalorder %s22, 7
      %p135 = scmp.ne.s32.totalorder %s130, %s132
      %p136 = scmp.eq.s32.totalorder %s22, 0
      %p137 = por %p135, %p136
      %p138 = scmp.ne.s32.totalorder %s130, %s132
      %p139 = scmp.eq.s32.totalorder %s27, 7
      %p140 = por %p138, %p139
      %p141 = scmp.ne.s32.totalorder %s132, %s133
      %p142 = scmp.eq.s32.totalorder %s27, 0
      %p143 = por %p141, %p142
      %p144 = scmp.ne.s32.totalorder %s132, %s133
      %p145 = scmp.eq.s32.totalorder %s28, 7
      %p146 = por %p144, %p145
      %p148 = scmp.ne.s32.totalorder %s133, %s147
      %p149 = scmp.eq.s32.totalorder %s28, 0
      %p150 = por %p148, %p149
      %s152 = sadd.s32 %s151, 1
      %p155 = scmp.eq.s32.totalorder %s22, 7
      %p156 = scmp.ne.s32.totalorder %s151, %s153
      %p157 = scmp.eq.s32.totalorder %s22, 0
      %p158 = por %p156, %p157
      %p159 = scmp.ne.s32.totalorder %s151, %s153
      %p160 = scmp.eq.s32.totalorder %s27, 7
      %p161 = por %p159, %p160
      %p162 = scmp.ne.s32.totalorder %s153, %s154
      %p163 = scmp.eq.s32.totalorder %s27, 0
      %p164 = por %p162, %p163
      %p165 = scmp.ne.s32.totalorder %s153, %s154
      %p166 = scmp.eq.s32.totalorder %s28, 7
      %p167 = por %p165, %p166
      %p169 = scmp.ne.s32.totalorder %s154, %s168
      %p170 = scmp.eq.s32.totalorder %s28, 0
      %p171 = por %p169, %p170
      %s173 = sadd.s32 %s172, 1
      %p176 = scmp.eq.s32.totalorder %s22, 7
      %p177 = scmp.ne.s32.totalorder %s172, %s174
      %p178 = scmp.eq.s32.totalorder %s22, 0
      %p179 = por %p177, %p178
      %p180 = scmp.ne.s32.totalorder %s172, %s174
      %p181 = scmp.eq.s32.totalorder %s27, 7
      %p182 = por %p180, %p181
      %p183 = scmp.ne.s32.totalorder %s174, %s175
      %p184 = scmp.eq.s32.totalorder %s27, 0
      %p185 = por %p183, %p184
      %p186 = scmp.ne.s32.totalorder %s174, %s175
      %p187 = scmp.eq.s32.totalorder %s28, 7
      %p188 = por %p186, %p187
      %p190 = scmp.ne.s32.totalorder %s175, %s189
      %p191 = scmp.eq.s32.totalorder %s28, 0
      %p192 = por %p190, %p191
      %s194 = sadd.s32 %s193, 1
      %p197 = scmp.eq.s32.totalorder %s22, 7
      %p198 = scmp.ne.s32.totalorder %s193, %s195
      %p199 = scmp.eq.s32.totalorder %s22, 0
      %p200 = por %p198, %p199
      %p201 = scmp.ne.s32.totalorder %s193, %s195
      %p202 = scmp.eq.s32.totalorder %s27, 7
      %p203 = por %p201, %p202
      %p204 = scmp.ne.s32.totalorder %s195, %s196
      %p205 = scmp.eq.s32.totalorder %s27, 0
      %p206 = por %p204, %p205
      %p207 = scmp.ne.s32.totalorder %s195, %s196
      %p208 = scmp.eq.s32.totalorder %s28, 7
      %p209 = por %p207, %p208
      %p211 = scmp.ne.s32.totalorder %s196, %s210
      %p212 = scmp.eq.s32.totalorder %s28, 0
      %p213 = por %p211, %p212
      %s214 = ssub.s32 %s29, %s41
      %s215 = ssub.s32 %s30, %s37
      %s216 = sor.u32 %s214, %s215
      %p217 = scmp.eq.s32.totalorder %s216, 0
      %s219 = sadd.s32 %s218, 1
      %s220 = scalar_select %p217, %s218, %s219
      %p223 = pneg %p217
      %p224 = scmp.eq.s32.totalorder %s22, 7
      %p225 = por %p223, %p224
      %p226 = scmp.ne.s32.totalorder %s218, %s221
      %p227 = scmp.eq.s32.totalorder %s22, 0
      %p228 = por %p226, %p227
      %p229 = scmp.ne.s32.totalorder %s218, %s221
      %p230 = scmp.eq.s32.totalorder %s27, 7
      %p231 = por %p229, %p230
      %p232 = scmp.ne.s32.totalorder %s221, %s222
      %p233 = scmp.eq.s32.totalorder %s27, 0
      %p234 = por %p232, %p233
      %p235 = scmp.ne.s32.totalorder %s221, %s222
      %p236 = scmp.eq.s32.totalorder %s28, 7
      %p237 = por %p235, %p236
      %p239 = scmp.ne.s32.totalorder %s222, %s238
      %p240 = scmp.eq.s32.totalorder %s28, 0
      %p241 = por %p239, %p240
      %p242 = scmp.le.s32.totalorder 1, %s22
      %p243 = scmp.lt.s32.totalorder %s22, 9
      %p244 = pnand %p242, %p243
      %p245 = pneg %p244
      // Predicated region
      $region9: #{tpu_custom_call.1} parent=5 // pred_check
        _
      $region10: #{tpu_custom_call.1} parent=5 // pred_check_branch
        %247 = sbr.rel (%p244) target = $region12
      $region11: #{tpu_custom_call.1} parent=5 // pred_region
        %s248 = ssub.s32 %s22, 1
        // Predicated region
        $region13: #{tpu_custom_call.1} parent=11 // pred_check
          %p249 = pneg %p143
        $region14: #{tpu_custom_call.1} parent=11 // pred_check_branch
          %251 = sbr.rel (%p249) target = $region16
        $region15: #{tpu_custom_call.1} parent=11 // pred_region
          _
        $region16: #{tpu_custom_call.1} parent=11 // pred_fallthru
          _
        // Predicated region
        $region17: #{tpu_custom_call.1} parent=11 // pred_check
          %p252 = pneg %p164
        $region18: #{tpu_custom_call.1} parent=11 // pred_check_branch
          %254 = sbr.rel (%p252) target = $region20
        $region19: #{tpu_custom_call.1} parent=11 // pred_region
          _
        $region20: #{tpu_custom_call.1} parent=11 // pred_fallthru
          _
        // Predicated region
        $region21: #{tpu_custom_call.1} parent=11 // pred_check
          %p255 = pneg %p185
        $region22: #{tpu_custom_call.1} parent=11 // pred_check_branch
          %257 = sbr.rel (%p255) target = $region24
        $region23: #{tpu_custom_call.1} parent=11 // pred_region
          _
        $region24: #{tpu_custom_call.1} parent=11 // pred_fallthru
          _
        // Predicated region
        $region25: #{tpu_custom_call.1} parent=11 // pred_check
          %p258 = pneg %p206
        $region26: #{tpu_custom_call.1} parent=11 // pred_check_branch
          %260 = sbr.rel (%p258) target = $region28
        $region27: #{tpu_custom_call.1} parent=11 // pred_region
          _
        $region28: #{tpu_custom_call.1} parent=11 // pred_fallthru
          _
      $region12: #{tpu_custom_call.1} parent=5 // pred_fallthru
        _
      %p261 = scmp.lt.s32.totalorder %s22, 8
      // Predicated region
      $region29: #{tpu_custom_call.1} parent=5 // pred_check
        %p262 = pneg %p261
      $region30: #{tpu_custom_call.1} parent=5 // pred_check_branch
        %264 = sbr.rel (%p262) target = $region32
      $region31: #{tpu_custom_call.1} parent=5 // pred_region
        // Predicated region
        $region33: #{tpu_custom_call.1} parent=31 // pred_check
          %p265 = pneg %p56
        $region34: #{tpu_custom_call.1} parent=31 // pred_check_branch
          %267 = sbr.rel (%p265) target = $region36
        $region35: #{tpu_custom_call.1} parent=31 // pred_region
          %s268 = sand.u32 %s46, 1
          %s269 = scalar_lea.sflag [#allocation3], %s268
          %s270 = sand.u32 %s46, 1
          %s271 = smul.addr %s270, 16
          %s272 = scalar_lea.vmem [#allocation2], %s271
          %s274 = ssub.s32 256, 256
          %275 = vsyncadd %s269, %s274
          %s276 = smul.addr %s29, 8
          %s277 = sadd.s32 %s30, %s276
          %s278 = smul.addr %s277, 128
          %s279 = scalar_lea.hbm %s0, %s278
          %s280 = sshll.u32 %s272, 4
          %s281 = int_to_ptr.vmem [resolvable:$true] %s280
          %286 = dma.hbm_to_vmem [thread:$0]  %s279, 256, %s281, %s269, 512, 128, 8
        $region36: #{tpu_custom_call.1} parent=31 // pred_fallthru
          _
        // Predicated region
        $region37: #{tpu_custom_call.1} parent=31 // pred_check
          %p287 = pneg %p90
        $region38: #{tpu_custom_call.1} parent=31 // pred_check_branch
          %289 = sbr.rel (%p287) target = $region40
        $region39: #{tpu_custom_call.1} parent=31 // pred_region
          %s290 = sand.u32 %s22, 1
          %s291 = scalar_lea.sflag [#allocation6], %s290
          %s292 = sand.u32 %s80, 1
          %s293 = smul.addr %s292, 16
          %s294 = scalar_lea.vmem [#allocation5], %s293
          %s295 = ssub.s32 %s30, 1
          %p296 = scmp.gt.s32.totalorder %s295, 0
          %s297 = scalar_select %p296, %s295, 0
          %s299 = ssub.s32 256, 256
          %300 = vsyncadd %s291, %s299
          %s301 = smul.addr %s29, 8
          %s302 = sadd.s32 %s297, %s301
          %s303 = smul.addr %s302, 128
          %s304 = scalar_lea.hbm %s1, %s303
          %s305 = sshll.u32 %s294, 4
          %s306 = int_to_ptr.vmem [resolvable:$true] %s305
          %311 = dma.hbm_to_vmem [thread:$0]  %s304, 256, %s306, %s291, 512, 128, 8
        $region40: #{tpu_custom_call.1} parent=31 // pred_fallthru
          _
        // Predicated region
        $region41: #{tpu_custom_call.1} parent=31 // pred_check
          %p312 = pneg %p116
        $region42: #{tpu_custom_call.1} parent=31 // pred_check_branch
          %314 = sbr.rel (%p312) target = $region44
        $region43: #{tpu_custom_call.1} parent=31 // pred_region
          %s315 = sand.u32 %s22, 1
          %s316 = scalar_lea.sflag [#allocation6], %s315
          %s317 = sand.u32 %s106, 1
          %s318 = smul.addr %s317, 16
          %s319 = scalar_lea.vmem [#allocation7], %s318
          %s321 = ssub.s32 256, 256
          %322 = vsyncadd %s316, %s321
          %s323 = smul.addr %s29, 2
          %s324 = smul.addr %s323, 128
          %s325 = scalar_lea.hbm %s2, %s324
          %s326 = sshll.u32 %s319, 4
          %s327 = int_to_ptr.vmem [resolvable:$true] %s326
          %332 = dma.hbm_to_vmem [thread:$0]  %s325, 256, %s327, %s316, 128, 128, 8
        $region44: #{tpu_custom_call.1} parent=31 // pred_fallthru
          _
      $region32: #{tpu_custom_call.1} parent=5 // pred_fallthru
        _
      %p333 = scmp.le.s32.totalorder 1, %s22
      %p334 = scmp.lt.s32.totalorder %s22, 9
      %p335 = pnand %p333, %p334
      %p336 = pneg %p335
      // Predicated region
      $region45: #{tpu_custom_call.1} parent=5 // pred_check
        _
      $region46: #{tpu_custom_call.1} parent=5 // pred_check_branch
        %338 = sbr.rel (%p335) target = $region48
      $region47: #{tpu_custom_call.1} parent=5 // pred_region
        %s339 = ssub.s32 %s22, 1
        %s340 = sand.u32 %s49, 1
        %s341 = scalar_lea.sflag [#allocation3], %s340
        %s342 = sand.u32 %s49, 1
        %s343 = smul.addr %s342, 16
        %s344 = scalar_lea.vmem [#allocation2], %s343
        // Predicated region
        $region49: #{tpu_custom_call.1} parent=47 // pred_check
          %p345 = pneg %p62
        $region50: #{tpu_custom_call.1} parent=47 // pred_check_branch
          %347 = sbr.rel (%p345) target = $region52
        $region51: #{tpu_custom_call.1} parent=47 // pred_region
          %348 = dma.done %s341, 256
        $region52: #{tpu_custom_call.1} parent=47 // pred_fallthru
          _
        %s349 = sand.u32 %s27, 1
        %s350 = scalar_lea.sflag [#allocation6], %s349
        %s351 = sand.u32 %s83, 1
        %s352 = smul.addr %s351, 16
        %s353 = scalar_lea.vmem [#allocation5], %s352
        // Predicated region
        $region53: #{tpu_custom_call.1} parent=47 // pred_check
          %p354 = pneg %p96
        $region54: #{tpu_custom_call.1} parent=47 // pred_check_branch
          %356 = sbr.rel (%p354) target = $region56
        $region55: #{tpu_custom_call.1} parent=47 // pred_region
          %357 = dma.done %s350, 256
        $region56: #{tpu_custom_call.1} parent=47 // pred_fallthru
          _
        %s358 = sand.u32 %s27, 1
        %s359 = scalar_lea.sflag [#allocation6], %s358
        %s360 = sand.u32 %s109, 1
        %s361 = smul.addr %s360, 16
        %s362 = scalar_lea.vmem [#allocation7], %s361
        // Predicated region
        $region57: #{tpu_custom_call.1} parent=47 // pred_check
          %p363 = pneg %p122
        $region58: #{tpu_custom_call.1} parent=47 // pred_check_branch
          %365 = sbr.rel (%p363) target = $region60
        $region59: #{tpu_custom_call.1} parent=47 // pred_region
          %366 = dma.done %s359, 256
        $region60: #{tpu_custom_call.1} parent=47 // pred_fallthru
          _
        %s367 = sand.u32 %s49, 1
        %s368 = scalar_lea.sflag [#allocation3], %s367
        %s369 = sand.u32 %s49, 1
        %s370 = smul.addr %s369, 16
        %s371 = scalar_lea.vmem [#allocation2], %s370
        %p372 = pneg %p62
        %p373 = pneg %p59
        %s374 = sand.u32 %s27, 1
        %s375 = scalar_lea.sflag [#allocation6], %s374
        %s376 = sand.u32 %s83, 1
        %s377 = smul.addr %s376, 16
        %s378 = scalar_lea.vmem [#allocation5], %s377
        %p379 = pneg %p96
        %p380 = pneg %p93
        %s381 = sand.u32 %s27, 1
        %s382 = scalar_lea.sflag [#allocation6], %s381
        %s383 = sand.u32 %s109, 1
        %s384 = smul.addr %s383, 16
        %s385 = scalar_lea.vmem [#allocation7], %s384
        %p386 = pneg %p122
        %p387 = pneg %p119
        %p388 = pneg %p143
        %p389 = pneg %p140
        %p390 = pneg %p164
        %p391 = pneg %p161
        %p392 = pneg %p185
        %p393 = pneg %p182
        %p394 = pneg %p206
        %p395 = pneg %p203
        %p396 = pneg %p234
        %p397 = pneg %p231
        %s398 = sand.u32 %s221, 1
        %s399 = scalar_lea.sflag [#allocation4], %s398
        %s400 = sand.u32 %s221, 1
        %s401 = smul.addr %s400, 16
        %s402 = scalar_lea.vmem [#allocation8], %s401
        %s403 = ssub.s32 %s32, 1
        %p404 = scmp.gt.s32.totalorder %s403, 0
        %s405 = scalar_select %p404, %s403, 0
        %v406 = vld [vmem:[%s344] sm:$0xff]
        %v407 = vld [vmem:[%s344 + $0x8] sm:$0xff]
        %v408 = vld [vmem:[%s353] sm:$0xff]
        %v409 = vld [vmem:[%s353 + $0x8] sm:$0xff]
        %v410 = vld [vmem:[%s362] sm:$0xff]
        %v411 = vld [vmem:[%s362 + $0x8] sm:$0xff]
        %p412 = scmp.eq.s32.totalorder %s32, 0
        %s413 = scalar_select %p412, 1, 0
        %v414 = vstv %s413
        %vm415 = vcmp.eq.s32.totalorder %v414, 1
        %v416 = vsel %vm415, %v410, %v408
        %v417 = vsel %vm415, %v411, %v409
        %420 = vrot.lane.b32.xlu0 %v416, 4
        %v421 = vpop.permute.xlu0 %420
        %422 = vrot.lane.b32.xlu0 %v417, 4
        %v423 = vpop.permute.xlu0 %422
        %428 = vrot.lane.b32.xlu0 %v406, 4
        %v429 = vpop.permute.xlu0 %428
        %430 = vrot.lane.b32.xlu0 %v407, 4
        %v431 = vpop.permute.xlu0 %430
        %vm434 = vcmask 31744
        %v435 = vsel %vm434, %v421, %v429
        %v436 = vsel %vm434, %v423, %v431
        %vm437 = vcmp.gt.f32.partialorder %v435, 0.0
        %vm438 = vcmp.gt.f32.partialorder %v429, 0.0
        %vm439 = vcmp.gt.f32.partialorder %v436, 0.0
        %vm440 = vcmp.gt.f32.partialorder %v431, 0.0
        %v441 = vmul.f32 %v435, 1.442695
        %v442 = vpow.pop %v441
        %v443 = vmul.f32 %v429, 1.442695
        %v444 = vpow.pop %v443
        %v445 = vmul.f32 %v436, 1.442695
        %v446 = vpow.pop %v445
        %v447 = vmul.f32 %v431, 1.442695
        %v448 = vpow.pop %v447
        %v449 = vsub.f32 %v442, 1.0
        %v450 = vsub.f32 %v444, 1.0
        %v451 = vsub.f32 %v446, 1.0
        %v452 = vsub.f32 %v448, 1.0
        %v453 = vsel %vm437, %v435, %v449
        %v454 = vsel %vm438, %v429, %v450
        %v455 = vsel %vm439, %v436, %v451
        %v456 = vsel %vm440, %v431, %v452
        %461 = vrot.lane.b32.xlu0 %v453, 126
        %v462 = vpop.permute.xlu0 %461
        %463 = vrot.lane.b32.xlu0 %v454, 126
        %v464 = vpop.permute.xlu0 %463
        %465 = vrot.lane.b32.xlu0 %v455, 126
        %v466 = vpop.permute.xlu0 %465
        %467 = vrot.lane.b32.xlu0 %v456, 126
        %v468 = vpop.permute.xlu0 %467
        %vm469 = vcmask 1031168
        %v470 = vsel %vm469, %v462, %v464
        %v471 = vsel %vm469, %v466, %v468
        %474 = vrot.lane.b32.xlu0 %v453, 124
        %v475 = vpop.permute.xlu0 %474
        %476 = vrot.lane.b32.xlu0 %v454, 124
        %v477 = vpop.permute.xlu0 %476
        %478 = vrot.lane.b32.xlu0 %v455, 124
        %v479 = vpop.permute.xlu0 %478
        %480 = vrot.lane.b32.xlu0 %v456, 124
        %v481 = vpop.permute.xlu0 %480
        %vm482 = vcmask 1014784
        %v483 = vsel %vm482, %v475, %v477
        %v484 = vsel %vm482, %v479, %v481
        %v487 = vld [vmem:[%s3] sm:$0xff]
        %v488 = vld [vmem:[%s4] sm:$0xff]
        %490 = vset.pattern.permute.xlu0 0
        %491 = vperm.xlu0 %490, %v488
        %v492 = vpop.permute.xlu0 %491
        %vm494 = vcmask 392192
        %v496 = vsel %vm494, %v487, 0
        %498 = vmatprep.subr.mxu0 0.0
        %499 = vmatpush1.msra.mxu0 0.0
        %500 = vmatprep.subr.mxu0 0.0
        %501 = vmatpush1.msra.mxu0 0.0
        %502 = vmatprep.subr.mxu0 0.0
        %503 = vmatpush1.msra.mxu0 0.0
        %504 = vmatprep.subr.mxu0 0.0
        %505 = vmatpush1.msra.mxu0 0.0
        %506 = vmatprep.subr.mxu0 0.0
        %507 = vmatpush1.msra.mxu0 0.0
        %508 = vmatprep.subr.mxu0 0.0
        %509 = vmatpush1.msra.mxu0 0.0
        %510 = vmatprep.subr.mxu0 0.0
        %511 = vmatpush1.msra.mxu0 0.0
        %512 = vmatprep.subr.mxu0 0.0
        %513 = vmatpush1.msra.mxu0 0.0
        %514 = vmatprep.subr.mxu0 0.0
        %515 = vmatpush1.msra.mxu0 0.0
        %516 = vmatprep.subr.mxu0 0.0
        %517 = vmatpush1.msra.mxu0 0.0
        %518 = vmatprep.subr.mxu0 0.0
        %519 = vmatpush1.msra.mxu0 %v484
        %520 = vmatprep.subr.mxu0 0.0
        %521 = vmatpush1.msra.mxu0 %v483
        %522 = vmatprep.subr.mxu0 0.0
        %523 = vmatpush1.msra.mxu0 %v471
        %524 = vmatprep.subr.mxu0 0.0
        %525 = vmatpush1.msra.mxu0 %v470
        %526 = vmatprep.subr.mxu0 0.0
        %527 = vmatpush1.msra.mxu0 %v455
        %528 = vmatprep.subr.mxu0 0.0
        %529 = vmatpush1.msra.mxu0 %v453
        %530 = vmatprep.subr.mxu0 0.0
        %531 = vmatpush2.msra.mxu0 0.0
        %532 = vmatprep.subr.mxu0 0.0
        %533 = vmatpush2.msra.mxu0 0.0
        %534 = vmatprep.subr.mxu0 0.0
        %535 = vmatpush2.msra.mxu0 0.0
        %536 = vmatprep.subr.mxu0 0.0
        %537 = vmatpush2.msra.mxu0 0.0
        %538 = vmatprep.subr.mxu0 0.0
        %539 = vmatpush2.msra.mxu0 0.0
        %540 = vmatprep.subr.mxu0 0.0
        %541 = vmatpush2.msra.mxu0 0.0
        %542 = vmatprep.subr.mxu0 0.0
        %543 = vmatpush2.msra.mxu0 0.0
        %544 = vmatprep.subr.mxu0 0.0
        %545 = vmatpush2.msra.mxu0 0.0
        %546 = vmatprep.subr.mxu0 0.0
        %547 = vmatpush2.msra.mxu0 0.0
        %548 = vmatprep.subr.mxu0 0.0
        %549 = vmatpush2.msra.mxu0 0.0
        %550 = vmatprep.subr.mxu0 0.0
        %551 = vmatpush2.msra.mxu0 0.0
        %552 = vmatprep.subr.mxu0 0.0
        %553 = vmatpush2.msra.mxu0 0.0
        %554 = vmatprep.subr.mxu0 0.0
        %555 = vmatpush2.msra.mxu0 0.0
        %556 = vmatprep.subr.mxu0 0.0
        %557 = vmatpush2.msra.mxu0 0.0
        %558 = vmatprep.subr.mxu0 0.0
        %559 = vmatpush2.msra.mxu0 0.0
        %560 = vmatprep.subr.mxu0 0.0
        %561 = vmatpush2.msra.mxu0 0.0
        %562 = vmatprep.mubr.f32.mxu0 0.0
        %563 = vmatmul.mubr.f32.gmra.mxu0 %v496
        %v564 = vpop.f32.mrf.mxu0
        %v565 = vadd.f32 %v492, %v564
        %v566 = vpop.f32.mrf.mxu0
        %567 = vdwg.mxu0
        %vm568 = vcmp.gt.f32.partialorder %v565, 0.0
        %v569 = vmul.f32 %v565, 1.442695
        %v570 = vpow.pop %v569
        %v571 = vsub.f32 %v570, 1.0
        %v572 = vsel %vm568, %v565, %v571
        %v573 = vld [vmem:[%s5] sm:$0xff]
        %v574 = vld [vmem:[%s5 + $0x8] sm:$0xff]
        %v575 = vld [vmem:[%s6] sm:$0xff]
        %v576 = vld [vmem:[%s6 + $0x8] sm:$0xff]
        %578 = vset.pattern.permute.xlu0 0
        %579 = vperm.xlu0 %578, %v575
        %v580 = vpop.permute.xlu0 %579
        %583 = vset.pattern.permute.xlu0 0
        %584 = vperm.xlu0 %583, %v576
        %v585 = vpop.permute.xlu0 %584
        %vm587 = vcmask 195584
        %v589 = vsel %vm587, %v573, 0
        %v592 = vsel %vm587, %v574, 0
        %594 = vmatprep.subr.mxu0 0.0
        %595 = vmatpush1.msra.mxu0 0.0
        %596 = vmatprep.subr.mxu0 0.0
        %597 = vmatpush1.msra.mxu0 0.0
        %598 = vmatprep.subr.mxu0 0.0
        %599 = vmatpush1.msra.mxu0 0.0
        %600 = vmatprep.subr.mxu0 0.0
        %601 = vmatpush1.msra.mxu0 0.0
        %602 = vmatprep.subr.mxu0 0.0
        %603 = vmatpush1.msra.mxu0 0.0
        %604 = vmatprep.subr.mxu0 0.0
        %605 = vmatpush1.msra.mxu0 0.0
        %606 = vmatprep.subr.mxu0 0.0
        %607 = vmatpush1.msra.mxu0 0.0
        %608 = vmatprep.subr.mxu0 0.0
        %609 = vmatpush1.msra.mxu0 0.0
        %610 = vmatprep.subr.mxu0 0.0
        %611 = vmatpush1.msra.mxu0 0.0
        %612 = vmatprep.subr.mxu0 0.0
        %613 = vmatpush1.msra.mxu0 0.0
        %614 = vmatprep.subr.mxu0 0.0
        %615 = vmatpush1.msra.mxu0 0.0
        %616 = vmatprep.subr.mxu0 0.0
        %617 = vmatpush1.msra.mxu0 0.0
        %618 = vmatprep.subr.mxu0 0.0
        %619 = vmatpush1.msra.mxu0 0.0
        %620 = vmatprep.subr.mxu0 0.0
        %621 = vmatpush1.msra.mxu0 %v407
        %622 = vmatprep.subr.mxu0 0.0
        %623 = vmatpush1.msra.mxu0 %v406
        %624 = vmatprep.subr.mxu0 0.0
        %625 = vmatpush1.msra.mxu0 %v572
        %626 = vmatprep.subr.mxu0 0.0
        %627 = vmatpush2.msra.mxu0 0.0
        %628 = vmatprep.subr.mxu0 0.0
        %629 = vmatpush2.msra.mxu0 0.0
        %630 = vmatprep.subr.mxu0 0.0
        %631 = vmatpush2.msra.mxu0 0.0
        %632 = vmatprep.subr.mxu0 0.0
        %633 = vmatpush2.msra.mxu0 0.0
        %634 = vmatprep.subr.mxu0 0.0
        %635 = vmatpush2.msra.mxu0 0.0
        %636 = vmatprep.subr.mxu0 0.0
        %637 = vmatpush2.msra.mxu0 0.0
        %638 = vmatprep.subr.mxu0 0.0
        %639 = vmatpush2.msra.mxu0 0.0
        %640 = vmatprep.subr.mxu0 0.0
        %641 = vmatpush2.msra.mxu0 0.0
        %642 = vmatprep.subr.mxu0 0.0
        %643 = vmatpush2.msra.mxu0 0.0
        %644 = vmatprep.subr.mxu0 0.0
        %645 = vmatpush2.msra.mxu0 0.0
        %646 = vmatprep.subr.mxu0 0.0
        %647 = vmatpush2.msra.mxu0 0.0
        %648 = vmatprep.subr.mxu0 0.0
        %649 = vmatpush2.msra.mxu0 0.0
        %650 = vmatprep.subr.mxu0 0.0
        %651 = vmatpush2.msra.mxu0 0.0
        %652 = vmatprep.subr.mxu0 0.0
        %653 = vmatpush2.msra.mxu0 0.0
        %654 = vmatprep.subr.mxu0 0.0
        %655 = vmatpush2.msra.mxu0 0.0
        %656 = vmatprep.subr.mxu0 0.0
        %657 = vmatpush2.msra.mxu0 0.0
        %658 = vmatprep.mubr.f32.mxu0 0.0
        %659 = vmatmul.mubr.f32.gmra.mxu0 %v589
        %v660 = vpop.f32.mrf.mxu0
        %v661 = vadd.f32 %v580, %v660
        %v662 = vpop.f32.mrf.mxu0
        %663 = vmatprep.mubr.f32.mxu0 0.0
        %664 = vmatmul.mubr.f32.gmra.mxu0 %v592
        %v665 = vpop.f32.mrf.mxu0
        %v666 = vadd.f32 %v585, %v665
        %v667 = vpop.f32.mrf.mxu0
        %668 = vdwg.mxu0
        %669 = vst [vmem:[%s402] sm:$0xff] %v661
        %670 = vst [vmem:[%s402 + $0x8] sm:$0xff] %v666
        %s671 = sand.u32 %s221, 1
        %s672 = scalar_lea.sflag [#allocation4], %s671
        %s673 = sand.u32 %s221, 1
        %s674 = smul.addr %s673, 16
        %s675 = scalar_lea.vmem [#allocation8], %s674
        // Predicated region
        $region61: #{tpu_custom_call.1} parent=47 // pred_check
          %p676 = pneg %p231
        $region62: #{tpu_custom_call.1} parent=47 // pred_check_branch
          %678 = sbr.rel (%p676) target = $region64
        $region63: #{tpu_custom_call.1} parent=47 // pred_region
          %s680 = ssub.s32 256, 256
          %681 = vsyncadd %s672, %s680
          %s682 = smul.addr %s31, 8
          %s683 = sadd.s32 %s32, %s682
          %s684 = smul.addr %s683, 128
          %s685 = scalar_lea.hbm %s7, %s684
          %s686 = sshll.u32 %s675, 4
          %s687 = int_to_ptr.vmem [resolvable:$true] %s686
          %692 = dma.vmem_to_hbm [thread:$0]  %s687, 256, %s685, %s672, 128, 512, 8
        $region64: #{tpu_custom_call.1} parent=47 // pred_fallthru
          _
      $region48: #{tpu_custom_call.1} parent=5 // pred_fallthru
        _
      %p693 = scmp.le.s32.totalorder 2, %s22
      // Predicated region
      $region65: #{tpu_custom_call.1} parent=5 // pred_check
        %p694 = pneg %p693
      $region66: #{tpu_custom_call.1} parent=5 // pred_check_branch
        %696 = sbr.rel (%p694) target = $region68
      $region67: #{tpu_custom_call.1} parent=5 // pred_region
        %s697 = ssub.s32 %s22, 2
        // Predicated region
        $region69: #{tpu_custom_call.1} parent=67 // pred_check
          %p698 = pneg %p237
        $region70: #{tpu_custom_call.1} parent=67 // pred_check_branch
          %700 = sbr.rel (%p698) target = $region72
        $region71: #{tpu_custom_call.1} parent=67 // pred_region
          %s701 = sand.u32 %s222, 1
          %s702 = scalar_lea.sflag [#allocation4], %s701
          %s703 = sand.u32 %s222, 1
          %s704 = smul.addr %s703, 16
          %s705 = scalar_lea.vmem [#allocation8], %s704
          %706 = dma.done %s702, 256
        $region72: #{tpu_custom_call.1} parent=67 // pred_fallthru
          _
      $region68: #{tpu_custom_call.1} parent=5 // pred_fallthru
        _
    $region6: #{tpu_custom_call.1} parent=1 // loop_footer
      %s26 = sadd.s32 1, %s22
    $region7: #{tpu_custom_call.1} parent=1 // loop_footer_branch
      %21 = sbr.rel target = $region3
    $region8: #{tpu_custom_call.1} parent=1 // loop_exit
      _
    %707 = vsyncpa [#allocation3], 1
    %s708 = scalar_lea.sflag [#allocation3], 1
    %709 = vsyncpa %s708, 1
    %710 = vsyncpa [#allocation6], 1
    %s711 = scalar_lea.sflag [#allocation6], 1
    %712 = vsyncpa %s711, 1
    %713 = vsyncpa [#allocation4], 1
    %s714 = scalar_lea.sflag [#allocation4], 1
    %715 = vsyncpa %s714, 1

</llo_original>
